<compile_context>
chip_gen: v6e
topology: v6e:2x2x1
jax: 0.10.0
libtpu: 0.0.40
codegen_flags: <defaults>
</compile_context>

<pallas_src>
import functools

import jax
import jax.numpy as jnp
from jax import lax
from jax.experimental import pallas as pl
from jax.experimental.pallas import tpu as pltpu

N_ESTIMATORS = 10  # matches ArfModel.__init__ (n_estimators = 10)


def _round_up(a: int, m: int) -> int:
    return ((a + m - 1) // m) * m


def _arf_kernel(x_ref, wt_ref, bt_ref, o_ref):
    """One tile of samples -> ensemble-averaged P(class 1), lane-dense row.

    x_ref : [TN, F]  sample features (VMEM tile, samples on sublanes)
    wt_ref: [E, F]   fused (w1 - w0)^T logit-difference weights, all estimators
    bt_ref: [E, 1]   fused (b1 - b0)^T biases
    o_ref : [1, TN]  ensemble-mean P(class 1), samples on the lane axis
    """
    e = wt_ref.shape[0]

    # z^T[e, tn] = sum_f wt[e, f] * x[tn, f]  -- single fused NT matmul on the
    # MXU (contract the feature axis of both operands, like q @ k^T).
    zt = lax.dot_general(
        wt_ref[...],
        x_ref[...],
        dimension_numbers=(((1,), (1,)), ((), ())),
        preferred_element_type=jnp.float32,
    ) + bt_ref[...]                                      # [E, TN]

    # Per-estimator 2-class softmax == sigmoid(l1 - l0); exp and the
    # approximate reciprocal both execute on the EUP (free VALU slots).
    p1 = pl.reciprocal(1.0 + jnp.exp(-zt), approx=True)  # [E, TN]

    # Ensemble average over the E estimators (sublane reduction) -> [1, TN],
    # stored lane-dense (unmasked vst).
    o_ref[...] = (jnp.sum(p1, axis=0, keepdims=True) * (1.0 / e)).astype(o_ref.dtype)


@functools.partial(jax.jit, static_argnames=("tile_n",))
def arf_predict_proba(x, w0, w1, b0, b1, *, tile_n=1024):
    """Pallas-backed equivalent of ArfModel.forward in eval mode.

    x  : [N, F] feature batch (any float dtype; cast to f32 once here).
    w0 : [F, E], w1: [F, E] per-class / per-estimator linear scorer weights.
    b0 : [1, E], b1: [1, E] biases.
    Returns [N, 2] float32 class probabilities (rows sum to 1).
    """
    n, f = x.shape
    e = w0.shape[1]

    x = x.astype(jnp.float32)
    # Fuse the two per-class scorers: the 2-way softmax only uses l1 - l0.
    w_t = jnp.transpose((w1 - w0).astype(jnp.float32))   # [E, F]
    b_t = jnp.transpose((b1 - b0).astype(jnp.float32))   # [E, 1]

    # Sample tile: multiple of 128 so the p1 output block is lane-dense and
    # the x block satisfies the (8, 128) sublane constraint.
    n128 = _round_up(n, 128)
    tile = min(_round_up(max(tile_n, 128), 128), n128)
    # Keep >= 2 grid steps when the batch allows it so megacore can split the
    # ("parallel",) sample axis across both TensorCores.
    if tile >= n128 and n128 >= 256:
        tile = _round_up(pl.cdiv(n128, 2), 128)
    n_pad = _round_up(n, tile)
    if n_pad != n:
        x = jnp.pad(x, ((0, n_pad - n), (0, 0)))

    grid = (n_pad // tile,)

    p1_row = pl.pallas_call(
        _arf_kernel,
        out_shape=jax.ShapeDtypeStruct((1, n_pad), jnp.float32),
        grid=grid,
        in_specs=[
            pl.BlockSpec((tile, f), lambda i: (i, 0)),  # x tile per grid step
            pl.BlockSpec((e, f), lambda i: (0, 0)),     # fused weights, resident
            pl.BlockSpec((e, 1), lambda i: (0, 0)),     # fused bias, resident
        ],
        out_specs=pl.BlockSpec((1, tile), lambda i: (0, i)),  # lane-dense p1
        compiler_params=pltpu.CompilerParams(
            dimension_semantics=("parallel",),
        ),
        cost_estimate=pl.CostEstimate(
            flops=2 * n_pad * f * e,
            transcendentals=n_pad * e,
            bytes_accessed=n_pad * f * 4 + e * f * 4 + e * 4 + n_pad * 4,
        ),
    )(x, w_t, b_t)

    # [N, 2] assembly (and dropping the pad rows) is cheap wrapper-side work,
    # fused by jit with whatever consumes the probabilities.
    p1 = p1_row[0, :n, None]                            # [N, 1]
    return jnp.concatenate([1.0 - p1, p1], axis=-1)     # [N, 2]


if __name__ == "__main__":
    # Small tabular-style shapes: 16 samples x 32 features, 10 estimators.
    N, F, E = 16, 32, N_ESTIMATORS

    key = jax.random.PRNGKey(0)
    kx, kw0, kw1, kb0, kb1 = jax.random.split(key, 5)

    x = jax.random.normal(kx, (N, F), dtype=jnp.float32)

    # Deterministic synthetic "forest" parameters (per-estimator linear scorers).
    w0 = 0.1 * jax.random.normal(kw0, (F, E), dtype=jnp.float32)
    w1 = 0.1 * jax.random.normal(kw1, (F, E), dtype=jnp.float32)
    b0 = 0.05 * jax.random.normal(kb0, (1, E), dtype=jnp.float32)
    b1 = 0.05 * jax.random.normal(kb1, (1, E), dtype=jnp.float32)

    out = arf_predict_proba(x, w0, w1, b0, b1)
    out = jax.block_until_ready(out)

    # Reference check in plain JAX (same surrogate math).  Tolerance covers
    # the EUP approximate reciprocal used for the in-kernel sigmoid.
    l0 = x @ w0 + b0
    l1 = x @ w1 + b1
    p1 = jax.nn.sigmoid(l1 - l0).mean(axis=-1, keepdims=True)
    ref = jnp.concatenate([1.0 - p1, p1], axis=-1)

    assert out.shape == (N, 2)
    assert jnp.allclose(out, ref, atol=1e-3), "mismatch vs reference"
    assert jnp.allclose(out.sum(axis=-1), 1.0, atol=1e-5), "rows must sum to 1"

    print("KERNEL_OK")
</pallas_src>

<mosaic_0001>
module attributes {stable_mosaic.version = 11 : i64} {
  func.func @_arf_kernel(%arg0: i32, %arg1: memref<128x32xf32, #tpu.memory_space<vmem>>, %arg2: memref<10x32xf32, #tpu.memory_space<vmem>>, %arg3: memref<10x1xf32, #tpu.memory_space<vmem>>, %arg4: memref<1x128xf32, #tpu.memory_space<vmem>>) attributes {dimension_semantics = [#tpu.dimension_semantics<parallel>], iteration_bounds = array<i64: 1>, scalar_prefetch = 0 : i64, scratch_operands = 0 : i64, tpu.core_type = #tpu.core_type<tc>, window_params = [{transform_indices = @transform_0, window_bounds = array<i64: 128, 32>}, {pipeline_mode = #tpu.pipeline_mode<synchronous>, transform_indices = @transform_1, window_bounds = array<i64: 10, 32>}, {pipeline_mode = #tpu.pipeline_mode<synchronous>, transform_indices = @transform_2, window_bounds = array<i64: 10, 1>}, {transform_indices = @transform_3, window_bounds = array<i64: 1, 128>}]} {
    %c0 = arith.constant 0 : index
    %c0_0 = arith.constant 0 : index
    %0 = vector.load %arg2[%c0, %c0_0] : memref<10x32xf32, #tpu.memory_space<vmem>>, vector<10x32xf32>
    %c0_1 = arith.constant 0 : index
    %c0_2 = arith.constant 0 : index
    %1 = vector.load %arg1[%c0_1, %c0_2] : memref<128x32xf32, #tpu.memory_space<vmem>>, vector<128x32xf32>
    %cst = arith.constant dense<0.000000e+00> : vector<10x128xf32>
    %2 = tpu.matmul %0, %1, %cst {dimension_numbers = #tpu.dot_dimension_numbers<[1], [1], [0], [0], [0, 0, 1, 0], [], []>} : vector<10x32xf32>, vector<128x32xf32>, vector<10x128xf32> -> vector<10x128xf32>
    %c0_3 = arith.constant 0 : index
    %c0_4 = arith.constant 0 : index
    %3 = vector.load %arg3[%c0_3, %c0_4] : memref<10x1xf32, #tpu.memory_space<vmem>>, vector<10x1xf32>
    %4 = vector.broadcast %3 : vector<10x1xf32> to vector<10x128xf32>
    %5 = arith.addf %2, %4 : vector<10x128xf32>
    %cst_5 = arith.constant 0.000000e+00 : f32
    %6 = vector.broadcast %cst_5 : f32 to vector<10x128xf32>
    %7 = arith.subf %6, %5 : vector<10x128xf32>
    %8 = math.exp %7 : vector<10x128xf32>
    %cst_6 = arith.constant 1.000000e+00 : f32
    %9 = vector.broadcast %cst_6 : f32 to vector<10x128xf32>
    %10 = arith.addf %9, %8 : vector<10x128xf32>
    %11 = tpu.reciprocal %10 {approx = true} : vector<10x128xf32> -> vector<10x128xf32>
    %cst_7 = arith.constant dense<0.000000e+00> : vector<128xf32>
    %12 = vector.multi_reduction <add>, %11, %cst_7 [0] : vector<10x128xf32> to vector<128xf32>
    %13 = vector.shape_cast %12 : vector<128xf32> to vector<1x128xf32>
    %cst_8 = arith.constant 1.000000e-01 : f32
    %14 = vector.broadcast %cst_8 : f32 to vector<1x128xf32>
    %15 = arith.mulf %13, %14 : vector<1x128xf32>
    %c0_9 = arith.constant 0 : index
    %c0_10 = arith.constant 0 : index
    %16 = vector.load %arg4[%c0_9, %c0_10] : memref<1x128xf32, #tpu.memory_space<vmem>>, vector<1x128xf32>
    tpu.vector_store %arg4[%c0_9, %c0_10], %15 {strides = array<i32>} : memref<1x128xf32, #tpu.memory_space<vmem>>, vector<1x128xf32>,
    return
  }
  func.func @transform_0(%arg0: i32) -> (i32, i32) {
    %c0_i32 = arith.constant 0 : i32
    %c0_i32_0 = arith.constant 0 : i32
    return %arg0, %c0_i32 : i32, i32
  }
  func.func @transform_1(%arg0: i32) -> (i32, i32) {
    %c0_i32 = arith.constant 0 : i32
    %c0_i32_0 = arith.constant 0 : i32
    %c0_i32_1 = arith.constant 0 : i32
    return %c0_i32, %c0_i32_0 : i32, i32
  }
  func.func @transform_2(%arg0: i32) -> (i32, i32) {
    %c0_i32 = arith.constant 0 : i32
    %c0_i32_0 = arith.constant 0 : i32
    %c0_i32_1 = arith.constant 0 : i32
    return %c0_i32, %c0_i32_0 : i32, i32
  }
  func.func @transform_3(%arg0: i32) -> (i32, i32) {
    %c0_i32 = arith.constant 0 : i32
    %c0_i32_0 = arith.constant 0 : i32
    return %c0_i32, %arg0 : i32, i32
  }
}

</mosaic_0001>

<llo_original>
// kernel: arf_predict_proba.1
$region0: #{arf_predict_proba.1}
  #allocation0 [shape = 'u32[]', space=smem, size = 0x4, offset = 0x4, fixed_abs, tag = 'smem constant byte address 0x4 - core index']
  #allocation1 [shape = 'u32[144,128]{1,0:T(1,128)}', space=vmem, size = 0x12000, scoped, tag = 'internal scratch']
  %s0 = inlined_call_operand.vmem [shape: f32[128,32], index: 0, kind: input, shape index: {}]
  %s1 = inlined_call_operand.vmem [shape: f32[10,32], index: 1, kind: input, shape index: {}]
  %s2 = inlined_call_operand.vmem [shape: f32[10,1], index: 2, kind: input, shape index: {}]
  %s3 = inlined_call_operand.vmem [shape: f32[1,128], index: 3, kind: output, shape index: {}]
  %s4 = sld [smem:[#allocation0]]
  $region22: #{arf_predict_proba.1} parent=0
    _
  %s6 = ssub.s32 1, %s4
  %s7 = scalar_select 0, %s6, %s4
  // Predicated region
  $region2: #{arf_predict_proba.1} parent=0 // pred_check
    _
  $region3: #{arf_predict_proba.1} parent=0 // pred_check_branch
    %9 = sbr.rel (0) target = $region5
  $region4: #{arf_predict_proba.1} parent=0 // pred_region
    _
  $region5: #{arf_predict_proba.1} parent=0 // pred_fallthru
    _
  // Predicated region
  $region6: #{arf_predict_proba.1} parent=0 // pred_check
    _
  $region7: #{arf_predict_proba.1} parent=0 // pred_check_branch
    %11 = sbr.rel (0) target = $region9
  $region8: #{arf_predict_proba.1} parent=0 // pred_region
    _
  $region9: #{arf_predict_proba.1} parent=0 // pred_fallthru
    _
  // Predicated region
  $region10: #{arf_predict_proba.1} parent=0 // pred_check
    _
  $region11: #{arf_predict_proba.1} parent=0 // pred_check_branch
    %13 = sbr.rel (0) target = $region13
  $region12: #{arf_predict_proba.1} parent=0 // pred_region
    _
  $region13: #{arf_predict_proba.1} parent=0 // pred_fallthru
    _
  %v14 = vld [vmem:[%s1] sm:$0xff]
  %v15 = vld [vmem:[%s1 + $0x8] sm:$0x3]
  %v16 = vld [vmem:[%s0] sm:$0xff]
  %v17 = vld [vmem:[%s0 + $0x8] sm:$0xff]
  %v18 = vld [vmem:[%s0 + $0x10] sm:$0xff]
  %v19 = vld [vmem:[%s0 + $0x18] sm:$0xff]
  %v20 = vld [vmem:[%s0 + $0x20] sm:$0xff]
  %v21 = vld [vmem:[%s0 + $0x28] sm:$0xff]
  %v22 = vld [vmem:[%s0 + $0x30] sm:$0xff]
  %v23 = vld [vmem:[%s0 + $0x38] sm:$0xff]
  %v24 = vld [vmem:[%s0 + $0x40] sm:$0xff]
  %v25 = vld [vmem:[%s0 + $0x48] sm:$0xff]
  %v26 = vld [vmem:[%s0 + $0x50] sm:$0xff]
  %v27 = vld [vmem:[%s0 + $0x58] sm:$0xff]
  %v28 = vld [vmem:[%s0 + $0x60] sm:$0xff]
  %v29 = vld [vmem:[%s0 + $0x68] sm:$0xff]
  %v30 = vld [vmem:[%s0 + $0x70] sm:$0xff]
  %v31 = vld [vmem:[%s0 + $0x78] sm:$0xff]
  %v32 = vld [vmem:[%s2] sm:$0xff]
  %v33 = vld [vmem:[%s2 + $0x8] sm:$0x3]
  %35 = vset.pattern.permute.xlu0 0
  %36 = vperm.xlu0 %35, %v32
  %v37 = vpop.permute.xlu0 %36
  %40 = vset.pattern.permute.xlu0 0
  %41 = vperm.xlu0 %40, %v33
  %v42 = vpop.permute.xlu0 %41
  %vm44 = vcmask 261120
  %v46 = vsel %vm44, %v14, 0
  %v49 = vsel %vm44, %v15, 0
  %v52 = vsel %vm44, %v16, 0
  %v55 = vsel %vm44, %v17, 0
  %v58 = vsel %vm44, %v18, 0
  %v61 = vsel %vm44, %v19, 0
  %v64 = vsel %vm44, %v20, 0
  %v67 = vsel %vm44, %v21, 0
  %v70 = vsel %vm44, %v22, 0
  %v73 = vsel %vm44, %v23, 0
  %v76 = vsel %vm44, %v24, 0
  %v79 = vsel %vm44, %v25, 0
  %v82 = vsel %vm44, %v26, 0
  %v85 = vsel %vm44, %v27, 0
  %v88 = vsel %vm44, %v28, 0
  %v91 = vsel %vm44, %v29, 0
  %v94 = vsel %vm44, %v30, 0
  %v97 = vsel %vm44, %v31, 0
  %99 = vmatprep.subr.mxu0 0.0
  %100 = vmatpush1.xpose.msra.mxu0 %v97
  %101 = vmatprep.subr.mxu0 0.0
  %102 = vmatpush1.xpose.msra.mxu0 %v94
  %103 = vmatprep.subr.mxu0 0.0
  %104 = vmatpush1.xpose.msra.mxu0 %v91
  %105 = vmatprep.subr.mxu0 0.0
  %106 = vmatpush1.xpose.msra.mxu0 %v88
  %107 = vmatprep.subr.mxu0 0.0
  %108 = vmatpush1.xpose.msra.mxu0 %v85
  %109 = vmatprep.subr.mxu0 0.0
  %110 = vmatpush1.xpose.msra.mxu0 %v82
  %111 = vmatprep.subr.mxu0 0.0
  %112 = vmatpush1.xpose.msra.mxu0 %v79
  %113 = vmatprep.subr.mxu0 0.0
  %114 = vmatpush1.xpose.msra.mxu0 %v76
  %115 = vmatprep.subr.mxu0 0.0
  %116 = vmatpush1.xpose.msra.mxu0 %v73
  %117 = vmatprep.subr.mxu0 0.0
  %118 = vmatpush1.xpose.msra.mxu0 %v70
  %119 = vmatprep.subr.mxu0 0.0
  %120 = vmatpush1.xpose.msra.mxu0 %v67
  %121 = vmatprep.subr.mxu0 0.0
  %122 = vmatpush1.xpose.msra.mxu0 %v64
  %123 = vmatprep.subr.mxu0 0.0
  %124 = vmatpush1.xpose.msra.mxu0 %v61
  %125 = vmatprep.subr.mxu0 0.0
  %126 = vmatpush1.xpose.msra.mxu0 %v58
  %127 = vmatprep.subr.mxu0 0.0
  %128 = vmatpush1.xpose.msra.mxu0 %v55
  %129 = vmatprep.subr.mxu0 0.0
  %130 = vmatpush1.xpose.msra.mxu0 %v52
  %131 = vmatprep.subr.mxu0 0.0
  %132 = vmatpush2.xpose.msra.mxu0 0.0
  %133 = vmatprep.subr.mxu0 0.0
  %134 = vmatpush2.xpose.msra.mxu0 0.0
  %135 = vmatprep.subr.mxu0 0.0
  %136 = vmatpush2.xpose.msra.mxu0 0.0
  %137 = vmatprep.subr.mxu0 0.0
  %138 = vmatpush2.xpose.msra.mxu0 0.0
  %139 = vmatprep.subr.mxu0 0.0
  %140 = vmatpush2.xpose.msra.mxu0 0.0
  %141 = vmatprep.subr.mxu0 0.0
  %142 = vmatpush2.xpose.msra.mxu0 0.0
  %143 = vmatprep.subr.mxu0 0.0
  %144 = vmatpush2.xpose.msra.mxu0 0.0
  %145 = vmatprep.subr.mxu0 0.0
  %146 = vmatpush2.xpose.msra.mxu0 0.0
  %147 = vmatprep.subr.mxu0 0.0
  %148 = vmatpush2.xpose.msra.mxu0 0.0
  %149 = vmatprep.subr.mxu0 0.0
  %150 = vmatpush2.xpose.msra.mxu0 0.0
  %151 = vmatprep.subr.mxu0 0.0
  %152 = vmatpush2.xpose.msra.mxu0 0.0
  %153 = vmatprep.subr.mxu0 0.0
  %154 = vmatpush2.xpose.msra.mxu0 0.0
  %155 = vmatprep.subr.mxu0 0.0
  %156 = vmatpush2.xpose.msra.mxu0 0.0
  %157 = vmatprep.subr.mxu0 0.0
  %158 = vmatpush2.xpose.msra.mxu0 0.0
  %159 = vmatprep.subr.mxu0 0.0
  %160 = vmatpush2.xpose.msra.mxu0 0.0
  %161 = vmatprep.subr.mxu0 0.0
  %162 = vmatpush2.xpose.msra.mxu0 0.0
  %163 = vmatprep.mubr.f32.mxu0 0.0
  %164 = vmatmul.mubr.f32.gmra.mxu0 %v46
  %v165 = vpop.f32.mrf.mxu0
  %v166 = vadd.f32 %v37, %v165
  %v167 = vpop.f32.mrf.mxu0
  %168 = vmatprep.mubr.f32.mxu0 0.0
  %169 = vmatmul.mubr.f32.gmra.mxu0 %v49
  %v170 = vpop.f32.mrf.mxu0
  %v171 = vadd.f32 %v42, %v170
  %v172 = vpop.f32.mrf.mxu0
  %173 = vdwg.mxu0
  %v174 = vsub.f32 0.0, %v166
  %v175 = vsub.f32 0.0, %v171
  %v176 = vmul.f32 %v174, 1.442695
  %v177 = vpow.pop %v176
  %v178 = vmul.f32 %v175, 1.442695
  %v179 = vpow.pop %v178
  %v180 = vadd.f32 %v177, 1.0
  %v181 = vadd.f32 %v179, 1.0
  %v182 = vrcp.pop %v180
  %v183 = vrcp.pop %v181
  %vm184 = vcmask 1041408
  %v185 = vsel %vm184, %v183, 0.0
  %v186 = vadd.f32 %v182, %v185
  %v187 = vrot.slane %v186, 4
  %v188 = vadd.f32 %v186, %v187
  %v189 = vrot.slane %v188, 2
  %v190 = vadd.f32 %v188, %v189
  %v191 = vrot.slane %v190, 1
  %v192 = vadd.f32 %v190, %v191
  %v193 = vmul.f32 %v192, 0.1
  %194 = vst [vmem:[%s3] sm:$0x1] %v193
  // Predicated region
  $region14: #{arf_predict_proba.1} parent=0 // pred_check
    _
  $region15: #{arf_predict_proba.1} parent=0 // pred_check_branch
    %196 = sbr.rel (0) target = $region17
  $region16: #{arf_predict_proba.1} parent=0 // pred_region
    _
  $region17: #{arf_predict_proba.1} parent=0 // pred_fallthru
    _
  // Predicated region
  $region18: #{arf_predict_proba.1} parent=0 // pred_check
    _
  $region19: #{arf_predict_proba.1} parent=0 // pred_check_branch
    %198 = sbr.rel (0) target = $region21
  $region20: #{arf_predict_proba.1} parent=0 // pred_region
    _
  $region21: #{arf_predict_proba.1} parent=0 // pred_fallthru
    _

</llo_original>
